<compile_context>
chip_gen: v7x
topology: tpu7x:2x2x1
jax: 0.10.0
libtpu: 0.0.40
codegen_flags: <defaults>
</compile_context>

<pallas_src>
import functools

import jax
import jax.numpy as jnp
from jax.experimental import pallas as pl
from jax.experimental.pallas import tpu as pltpu


def _round_up(v: int, m: int) -> int:
    return (v + m - 1) // m * m


def _device_kind() -> str:
    try:
        return jax.devices()[0].device_kind.lower()
    except Exception:  # defensive: never fail the wrapper on introspection
        return ""


def _lane_multiple(dim: int) -> int:
    # v6e/v7x MXUs are 2x256x256: a 128-wide contraction/output half-fills the
    # systolic array, so pad dims that are already >=256 up to 256 there.
    # v5e's 4x128x128 MXU is saturated at 128, so don't over-pad.
    if dim < 256:
        return 128
    return 128 if "v5" in _device_kind() else 256


def _vmem_limit_bytes(needed: int) -> int:
    kind = _device_kind()
    # v5e/v6e: 128 MiB physical VMEM -> allow up to ~100 MiB scoped.
    # v7x (or unknown): 64 MiB physical -> leave >= 8 MiB headroom for Mosaic.
    cap = (100 * 2**20) if ("v5" in kind or "v6" in kind) else (56 * 2**20)
    return int(min(max(needed + 8 * 2**20, 32 * 2**20), cap))


def _ffn_kernel_resident(x_ref, w1_ref, b1_ref, w2_ref, b2_ref, o_ref):
    # x_ref : (TM, Ep)  stream dtype     w1_ref: (Ep, Fp) compute dtype
    # b1_ref: (1, Fp)   f32              w2_ref: (Fp, Ep) compute dtype
    # b2_ref: (1, Ep)   f32              o_ref : (TM, Ep) out dtype
    x = x_ref[...]
    h = jnp.dot(x.astype(w1_ref.dtype), w1_ref[...],
                preferred_element_type=jnp.float32)
    h = jnp.maximum(h + b1_ref[...], 0.0)                  # bias + ReLU (f32, VPU)
    y = jnp.dot(h.astype(w2_ref.dtype), w2_ref[...],
                preferred_element_type=jnp.float32)
    y = y + b2_ref[...] + x.astype(jnp.float32)            # bias + residual (f32)
    o_ref[...] = y.astype(o_ref.dtype)


def _ffn_kernel_fsplit(x_ref, w1_ref, b1_ref, w2_ref, b2_ref, o_ref, acc_ref):
    # Grid = (num_m, num_f); F is the trailing ("arbitrary") reduction axis.
    # ReLU is elementwise over F columns, so the second contraction distributes
    # over F tiles:  y = sum_f relu(x @ W1_f + b1_f) @ W2_f.
    j = pl.program_id(1)

    @pl.when(j == 0)
    def _():
        acc_ref[...] = jnp.zeros_like(acc_ref)

    x = x_ref[...]
    h = jnp.dot(x.astype(w1_ref.dtype), w1_ref[...],
                preferred_element_type=jnp.float32)
    h = jnp.maximum(h + b1_ref[...], 0.0)
    acc_ref[...] += jnp.dot(h.astype(w2_ref.dtype), w2_ref[...],
                            preferred_element_type=jnp.float32)

    @pl.when(j == pl.num_programs(1) - 1)
    def _():
        y = acc_ref[...] + b2_ref[...] + x.astype(jnp.float32)
        o_ref[...] = y.astype(o_ref.dtype)


@functools.partial(
    jax.jit,
    static_argnames=("compute_dtype", "block_m", "block_f", "use_pallas"))
def position_wise_feed_forward(x, w1, b1, w2, b2, *,
                               compute_dtype=jnp.bfloat16,
                               block_m=1024,
                               block_f=None,
                               use_pallas=None):
    """out = relu(x @ w1 + b1) @ w2 + b2 + x   (dropout = identity, eval mode).

    x: (B, S, E); w1: (E, F); b1: (F,); w2: (F, E); b2: (E,).
    """
    B, S, E = x.shape
    F_ = w1.shape[1]
    M = B * S

    if use_pallas is None:
        # Tiny layers: most MXU work would multiply zero padding and wall time
        # is per-call / per-grid-step overhead -> let XLA fuse them instead.
        use_pallas = (E >= 128 and F_ >= 128 and M >= 64)
    if not use_pallas:
        h = jnp.maximum(jnp.einsum("bse,ef->bsf", x, w1) + b1, 0.0)
        return (jnp.einsum("bsf,fe->bse", h, w2) + b2 + x).astype(x.dtype)

    w_item = jnp.dtype(compute_dtype).itemsize
    x_item = jnp.dtype(x.dtype).itemsize
    out_dtype = x.dtype
    out_item = jnp.dtype(out_dtype).itemsize

    lane_e = _lane_multiple(E)
    lane_f = _lane_multiple(F_)
    Ep = _round_up(E, lane_e)
    Fp = _round_up(F_, lane_f)

    # --- F tiling: fully VMEM-resident weights vs. F-split reduction ---------
    if block_f is not None:
        TF = min(_round_up(block_f, lane_f), Fp)
    elif 2 * Ep * Fp * w_item <= 24 * 2**20:
        TF = Fp                       # weights stay resident across the M loop
    else:
        # Production-size fallback: stream (Ep, TF)/(TF, Ep) weight tiles and
        # accumulate the second matmul over F in an f32 scratch.
        TF = max(lane_f, ((6 * 2**20) // (Ep * w_item)) // lane_f * lane_f)
        TF = min(TF, Fp)
    # Ragged F tiles would contaminate valid output columns, so F is padded to
    # a multiple of TF (padded W1 cols / W2 rows / b1 entries are zero).
    Fp = _round_up(Fp, TF)
    num_f = Fp // TF

    # --- M tiling -------------------------------------------------------------
    TM = min(block_m, _round_up(M, 16))     # multiple of 16 covers f32 & bf16
    # Keep the f32 hidden tile h = (TM, TF) under ~8 MiB (VMEM pressure/spills).
    max_tm = max(16, ((8 * 2**20) // (4 * TF)) // 16 * 16)
    TM = min(TM, max_tm)
    num_m = pl.cdiv(M, TM)                  # ragged last M tile: OOB rows only
                                            # feed discarded output rows.

    # --- operand preparation (only E may need a zero pad) ----------------------
    x2d = x.reshape(M, E)
    if Ep != E:
        x2d = jnp.pad(x2d, ((0, 0), (0, Ep - E)))
    w1p = jnp.pad(w1, ((0, Ep - E), (0, Fp - F_))).astype(compute_dtype)
    w2p = jnp.pad(w2, ((0, Fp - F_), (0, Ep - E))).astype(compute_dtype)
    b1p = jnp.pad(b1, (0, Fp - F_)).reshape(1, Fp).astype(jnp.float32)
    b2p = jnp.pad(b2, (0, Ep - E)).reshape(1, Ep).astype(jnp.float32)

    cost = pl.CostEstimate(
        flops=4 * M * Ep * Fp,
        transcendentals=0,
        bytes_accessed=int(M * Ep * (x_item + out_item)
                           + 2 * Ep * Fp * w_item + 4 * (Fp + Ep)),
    )

    resident = pl.Buffered(1)   # constant-index blocks -> single VMEM buffer

    if num_f == 1:
        vmem_needed = (2 * Ep * Fp * w_item + 4 * (Fp + Ep)        # weights+bias
                       + 2 * TM * Ep * (x_item + out_item)          # x/out tiles
                       + TM * Fp * (4 + w_item))                    # h + bf16 h
        out2d = pl.pallas_call(
            _ffn_kernel_resident,
            out_shape=jax.ShapeDtypeStruct((M, Ep), out_dtype),
            grid_spec=pltpu.PrefetchScalarGridSpec(
                num_scalar_prefetch=0,
                grid=(num_m,),
                in_specs=[
                    # x: one (TM, Ep) tile per grid step -> pipelined streaming.
                    pl.BlockSpec((TM, Ep), lambda i: (i, 0)),
                    # Weights/biases: constant index maps + single buffer.
                    pl.BlockSpec((Ep, Fp), lambda i: (0, 0),
                                 pipeline_mode=resident),
                    pl.BlockSpec((1, Fp), lambda i: (0, 0),
                                 pipeline_mode=resident),
                    pl.BlockSpec((Fp, Ep), lambda i: (0, 0),
                                 pipeline_mode=resident),
                    pl.BlockSpec((1, Ep), lambda i: (0, 0),
                                 pipeline_mode=resident),
                ],
                out_specs=pl.BlockSpec((TM, Ep), lambda i: (i, 0)),
            ),
            compiler_params=pltpu.CompilerParams(
                dimension_semantics=("parallel",),
                vmem_limit_bytes=_vmem_limit_bytes(vmem_needed),
            ),
            cost_estimate=cost,
        )(x2d, w1p, b1p, w2p, b2p)
    else:
        vmem_needed = (2 * 2 * Ep * TF * w_item + 4 * (TF + Ep)     # weight tiles
                       + 2 * TM * Ep * (x_item + out_item)          # x/out tiles
                       + TM * TF * (4 + w_item)                     # h + bf16 h
                       + TM * Ep * 4)                               # accumulator
        out2d = pl.pallas_call(
            _ffn_kernel_fsplit,
            out_shape=jax.ShapeDtypeStruct((M, Ep), out_dtype),
            grid_spec=pltpu.PrefetchScalarGridSpec(
                num_scalar_prefetch=0,
                grid=(num_m, num_f),
                in_specs=[
                    pl.BlockSpec((TM, Ep), lambda i, j: (i, 0)),
                    pl.BlockSpec((Ep, TF), lambda i, j: (0, j)),
                    pl.BlockSpec((1, TF), lambda i, j: (0, j)),
                    pl.BlockSpec((TF, Ep), lambda i, j: (j, 0)),
                    pl.BlockSpec((1, Ep), lambda i, j: (0, 0),
                                 pipeline_mode=resident),
                ],
                out_specs=pl.BlockSpec((TM, Ep), lambda i, j: (i, 0)),
                scratch_shapes=[pltpu.VMEM((TM, Ep), jnp.float32)],
            ),
            compiler_params=pltpu.CompilerParams(
                dimension_semantics=("parallel", "arbitrary"),
                vmem_limit_bytes=_vmem_limit_bytes(vmem_needed),
            ),
            cost_estimate=cost,
        )(x2d, w1p, b1p, w2p, b2p)

    if Ep != E:
        out2d = out2d[:, :E]
    return out2d.reshape(B, S, E)


if __name__ == "__main__":
    key = jax.random.PRNGKey(0)

    def make_params(k, E, Dff):
        # nn.Linear(emb_dim, d_ff) / nn.Linear(d_ff, emb_dim) (weights passed
        # transposed so the kernel computes x @ W^T like the PyTorch layer).
        k1, kb1, k2, kb2 = jax.random.split(k, 4)
        lim1 = 1.0 / (E ** 0.5)
        w1 = jax.random.uniform(k1, (E, Dff), minval=-lim1, maxval=lim1,
                                dtype=jnp.float32)
        b1 = jax.random.uniform(kb1, (Dff,), minval=-lim1, maxval=lim1,
                                dtype=jnp.float32)
        lim2 = 1.0 / (Dff ** 0.5)
        w2 = jax.random.uniform(k2, (Dff, E), minval=-lim2, maxval=lim2,
                                dtype=jnp.float32)
        b2 = jax.random.uniform(kb2, (E,), minval=-lim2, maxval=lim2,
                                dtype=jnp.float32)
        return w1, b1, w2, b2

    def reference(x, w1, b1, w2, b2):
        xf = x.astype(jnp.float32)
        h = jnp.maximum(xf @ w1 + b1, 0.0)
        return h @ w2 + b2 + xf

    # --- Test 1: module-default tiny shapes, f32, forced through the kernel
    # (resident-weight path, E padded 32 -> 128). -----------------------------
    B, S, E, Dff = 2, 8, 32, 64
    kx, kp, key = jax.random.split(key, 3)
    x = jax.random.normal(kx, (B, S, E), dtype=jnp.float32)
    w1, b1, w2, b2 = make_params(kp, E, Dff)
    out = jax.block_until_ready(
        position_wise_feed_forward(x, w1, b1, w2, b2, use_pallas=True))
    ref = reference(x, w1, b1, w2, b2)
    assert out.shape == (B, S, E) and out.dtype == x.dtype
    assert jnp.allclose(out, ref, atol=5e-2, rtol=5e-2), "tiny-case mismatch"

    # --- Test 2: bf16 activations (bf16 streamed both ways), lane-aligned E,
    # ragged M tail (M=576, TM=512), forced F-split reduction path. -----------
    B, S, E, Dff = 2, 288, 256, 512
    kx, kp, key = jax.random.split(key, 3)
    x = jax.random.normal(kx, (B, S, E), dtype=jnp.float32).astype(jnp.bfloat16)
    w1, b1, w2, b2 = make_params(kp, E, Dff)
    out = jax.block_until_ready(
        position_wise_feed_forward(x, w1, b1, w2, b2, block_m=512, block_f=256))
    ref = reference(x, w1, b1, w2, b2)
    assert out.shape == (B, S, E) and out.dtype == x.dtype
    assert jnp.allclose(out.astype(jnp.float32), ref, atol=1.5e-1, rtol=1.5e-1), \
        "f-split-case mismatch"

    print("KERNEL_OK")
</pallas_src>

<mosaic_0001>
module attributes {stable_mosaic.version = 11 : i64} {
  func.func @_ffn_kernel_resident(%arg0: i32, %arg1: memref<16x128xf32, #tpu.memory_space<vmem>>, %arg2: memref<128x128xbf16, #tpu.memory_space<vmem>>, %arg3: memref<1x128xf32, #tpu.memory_space<vmem>>, %arg4: memref<128x128xbf16, #tpu.memory_space<vmem>>, %arg5: memref<1x128xf32, #tpu.memory_space<vmem>>, %arg6: memref<16x128xf32, #tpu.memory_space<vmem>>) attributes {dimension_semantics = [#tpu.dimension_semantics<parallel>], iteration_bounds = array<i64: 1>, scalar_prefetch = 0 : i64, scratch_operands = 0 : i64, tpu.core_type = #tpu.core_type<tc>, window_params = [{transform_indices = @transform_0, window_bounds = array<i64: 16, 128>}, {pipeline_mode = #tpu.pipeline_mode<synchronous>, transform_indices = @transform_1, window_bounds = array<i64: 128, 128>}, {pipeline_mode = #tpu.pipeline_mode<synchronous>, transform_indices = @transform_2, window_bounds = array<i64: 1, 128>}, {pipeline_mode = #tpu.pipeline_mode<synchronous>, transform_indices = @transform_3, window_bounds = array<i64: 128, 128>}, {pipeline_mode = #tpu.pipeline_mode<synchronous>, transform_indices = @transform_4, window_bounds = array<i64: 1, 128>}, {transform_indices = @transform_5, window_bounds = array<i64: 16, 128>}]} {
    %c0 = arith.constant 0 : index
    %c0_0 = arith.constant 0 : index
    %0 = vector.load %arg1[%c0, %c0_0] : memref<16x128xf32, #tpu.memory_space<vmem>>, vector<16x128xf32>
    %1 = arith.truncf %0 : vector<16x128xf32> to vector<16x128xbf16>
    %c0_1 = arith.constant 0 : index
    %c0_2 = arith.constant 0 : index
    %2 = vector.load %arg2[%c0_1, %c0_2] : memref<128x128xbf16, #tpu.memory_space<vmem>>, vector<128x128xbf16>
    %cst = arith.constant dense<0.000000e+00> : vector<16x128xf32>
    %3 = tpu.matmul %1, %2, %cst {dimension_numbers = #tpu.dot_dimension_numbers<[1], [0], [0], [1], [0, 0, 1, 1], [], []>} : vector<16x128xbf16>, vector<128x128xbf16>, vector<16x128xf32> -> vector<16x128xf32>
    %c0_3 = arith.constant 0 : index
    %c0_4 = arith.constant 0 : index
    %4 = vector.load %arg3[%c0_3, %c0_4] : memref<1x128xf32, #tpu.memory_space<vmem>>, vector<1x128xf32>
    %5 = vector.broadcast %4 : vector<1x128xf32> to vector<16x128xf32>
    %6 = arith.addf %3, %5 : vector<16x128xf32>
    %cst_5 = arith.constant 0.000000e+00 : f32
    %7 = vector.broadcast %cst_5 : f32 to vector<16x128xf32>
    %8 = arith.maximumf %6, %7 : vector<16x128xf32>
    %9 = arith.truncf %8 : vector<16x128xf32> to vector<16x128xbf16>
    %c0_6 = arith.constant 0 : index
    %c0_7 = arith.constant 0 : index
    %10 = vector.load %arg4[%c0_6, %c0_7] : memref<128x128xbf16, #tpu.memory_space<vmem>>, vector<128x128xbf16>
    %cst_8 = arith.constant dense<0.000000e+00> : vector<16x128xf32>
    %11 = tpu.matmul %9, %10, %cst_8 {dimension_numbers = #tpu.dot_dimension_numbers<[1], [0], [0], [1], [0, 0, 1, 1], [], []>} : vector<16x128xbf16>, vector<128x128xbf16>, vector<16x128xf32> -> vector<16x128xf32>
    %c0_9 = arith.constant 0 : index
    %c0_10 = arith.constant 0 : index
    %12 = vector.load %arg5[%c0_9, %c0_10] : memref<1x128xf32, #tpu.memory_space<vmem>>, vector<1x128xf32>
    %13 = vector.broadcast %12 : vector<1x128xf32> to vector<16x128xf32>
    %14 = arith.addf %11, %13 : vector<16x128xf32>
    %15 = arith.addf %14, %0 : vector<16x128xf32>
    %c0_11 = arith.constant 0 : index
    %c0_12 = arith.constant 0 : index
    %16 = vector.load %arg6[%c0_11, %c0_12] : memref<16x128xf32, #tpu.memory_space<vmem>>, vector<16x128xf32>
    tpu.vector_store %arg6[%c0_11, %c0_12], %15 {strides = array<i32>} : memref<16x128xf32, #tpu.memory_space<vmem>>, vector<16x128xf32>,
    return
  }
  func.func @transform_0(%arg0: i32) -> (i32, i32) {
    %c0_i32 = arith.constant 0 : i32
    %c0_i32_0 = arith.constant 0 : i32
    return %arg0, %c0_i32 : i32, i32
  }
  func.func @transform_1(%arg0: i32) -> (i32, i32) {
    %c0_i32 = arith.constant 0 : i32
    %c0_i32_0 = arith.constant 0 : i32
    %c0_i32_1 = arith.constant 0 : i32
    return %c0_i32, %c0_i32_0 : i32, i32
  }
  func.func @transform_2(%arg0: i32) -> (i32, i32) {
    %c0_i32 = arith.constant 0 : i32
    %c0_i32_0 = arith.constant 0 : i32
    %c0_i32_1 = arith.constant 0 : i32
    return %c0_i32, %c0_i32_0 : i32, i32
  }
  func.func @transform_3(%arg0: i32) -> (i32, i32) {
    %c0_i32 = arith.constant 0 : i32
    %c0_i32_0 = arith.constant 0 : i32
    %c0_i32_1 = arith.constant 0 : i32
    return %c0_i32, %c0_i32_0 : i32, i32
  }
  func.func @transform_4(%arg0: i32) -> (i32, i32) {
    %c0_i32 = arith.constant 0 : i32
    %c0_i32_0 = arith.constant 0 : i32
    %c0_i32_1 = arith.constant 0 : i32
    return %c0_i32, %c0_i32_0 : i32, i32
  }
  func.func @transform_5(%arg0: i32) -> (i32, i32) {
    %c0_i32 = arith.constant 0 : i32
    %c0_i32_0 = arith.constant 0 : i32
    return %arg0, %c0_i32 : i32, i32
  }
}

</mosaic_0001>

<llo_original>
// kernel: position_wise_feed_forward.1
$region0: #{position_wise_feed_forward.1}
  #allocation0 [shape = 'u32[]', space=smem, size = 0x4, offset = 0x4, fixed_abs, tag = 'smem constant byte address 0x4 - core index']
  #allocation1 [shape = 'u32[144,128]{1,0:T(1,128)}', space=vmem, size = 0x12000, scoped, tag = 'internal scratch']
  %s0 = inlined_call_operand.vmem [shape: f32[16,128], index: 0, kind: input, shape index: {}]
  %s1 = inlined_call_operand.vmem [shape: bf16[128,128], index: 1, kind: input, shape index: {}]
  %s2 = inlined_call_operand.vmem [shape: f32[1,128], index: 2, kind: input, shape index: {}]
  %s3 = inlined_call_operand.vmem [shape: bf16[128,128], index: 3, kind: input, shape index: {}]
  %s4 = inlined_call_operand.vmem [shape: f32[1,128], index: 4, kind: input, shape index: {}]
  %s5 = inlined_call_operand.vmem [shape: f32[16,128], index: 5, kind: output, shape index: {}]
  %s6 = sld [smem:[#allocation0]]
  $region30: #{position_wise_feed_forward.1} parent=0
    _
  %s8 = ssub.s32 1, %s6
  %s9 = scalar_select 0, %s8, %s6
  // Predicated region
  $region2: #{position_wise_feed_forward.1} parent=0 // pred_check
    _
  $region3: #{position_wise_feed_forward.1} parent=0 // pred_check_branch
    %11 = sbr.rel (0) target = $region5
  $region4: #{position_wise_feed_forward.1} parent=0 // pred_region
    _
  $region5: #{position_wise_feed_forward.1} parent=0 // pred_fallthru
    _
  // Predicated region
  $region6: #{position_wise_feed_forward.1} parent=0 // pred_check
    _
  $region7: #{position_wise_feed_forward.1} parent=0 // pred_check_branch
    %13 = sbr.rel (0) target = $region9
  $region8: #{position_wise_feed_forward.1} parent=0 // pred_region
    _
  $region9: #{position_wise_feed_forward.1} parent=0 // pred_fallthru
    _
  // Predicated region
  $region10: #{position_wise_feed_forward.1} parent=0 // pred_check
    _
  $region11: #{position_wise_feed_forward.1} parent=0 // pred_check_branch
    %15 = sbr.rel (0) target = $region13
  $region12: #{position_wise_feed_forward.1} parent=0 // pred_region
    _
  $region13: #{position_wise_feed_forward.1} parent=0 // pred_fallthru
    _
  // Predicated region
  $region14: #{position_wise_feed_forward.1} parent=0 // pred_check
    _
  $region15: #{position_wise_feed_forward.1} parent=0 // pred_check_branch
    %17 = sbr.rel (0) target = $region17
  $region16: #{position_wise_feed_forward.1} parent=0 // pred_region
    _
  $region17: #{position_wise_feed_forward.1} parent=0 // pred_fallthru
    _
  // Predicated region
  $region18: #{position_wise_feed_forward.1} parent=0 // pred_check
    _
  $region19: #{position_wise_feed_forward.1} parent=0 // pred_check_branch
    %19 = sbr.rel (0) target = $region21
  $region20: #{position_wise_feed_forward.1} parent=0 // pred_region
    _
  $region21: #{position_wise_feed_forward.1} parent=0 // pred_fallthru
    _
  %v21 = vld [vmem:[%s0] sm:$0xff]
  %v22 = vld [vmem:[%s0 + $0x8] sm:$0xff]
  %v23 = vpack.c.bf16 %v22, %v21
  %v24 = vld [vmem:[%s1] sm:$0xf]
  %v25 = vld [vmem:[%s1 + $0x4] sm:$0xf]
  %v26 = vld [vmem:[%s1 + $0x8] sm:$0xf]
  %v27 = vld [vmem:[%s1 + $0xc] sm:$0xf]
  %v28 = vld [vmem:[%s1 + $0x10] sm:$0xf]
  %v29 = vld [vmem:[%s1 + $0x14] sm:$0xf]
  %v30 = vld [vmem:[%s1 + $0x18] sm:$0xf]
  %v31 = vld [vmem:[%s1 + $0x1c] sm:$0xf]
  %v32 = vld [vmem:[%s1 + $0x20] sm:$0xf]
  %v33 = vld [vmem:[%s1 + $0x24] sm:$0xf]
  %v34 = vld [vmem:[%s1 + $0x28] sm:$0xf]
  %v35 = vld [vmem:[%s1 + $0x2c] sm:$0xf]
  %v36 = vld [vmem:[%s1 + $0x30] sm:$0xf]
  %v37 = vld [vmem:[%s1 + $0x34] sm:$0xf]
  %v38 = vld [vmem:[%s1 + $0x38] sm:$0xf]
  %v39 = vld [vmem:[%s1 + $0x3c] sm:$0xf]
  %v40 = vld [vmem:[%s2] sm:$0x1]
  %v42 = vlaneseq
  %v43 = vshrl.u32 %v42, 7
  %v44 = vsub.s32 0, %v43
  %v45 = vrot.slane %v40, %v44
  %v63 = vunpack.c.l.b16 %v24
  %v64 = vunpack.c.l.b16 %v25
  %v65 = vunpack.c.l.b16 %v26
  %v66 = vunpack.c.l.b16 %v27
  %v67 = vunpack.c.l.b16 %v28
  %v68 = vunpack.c.l.b16 %v29
  %v69 = vunpack.c.l.b16 %v30
  %v70 = vunpack.c.l.b16 %v31
  %v71 = vunpack.c.l.b16 %v32
  %v72 = vunpack.c.l.b16 %v33
  %v73 = vunpack.c.l.b16 %v34
  %v74 = vunpack.c.l.b16 %v35
  %v75 = vunpack.c.l.b16 %v36
  %v76 = vunpack.c.l.b16 %v37
  %v77 = vunpack.c.l.b16 %v38
  %v78 = vunpack.c.l.b16 %v39
  %v79 = vpack.c.b16 %v64, %v63
  %v80 = vpack.c.b16 %v66, %v65
  %v81 = vpack.c.b16 %v68, %v67
  %v82 = vpack.c.b16 %v70, %v69
  %v83 = vpack.c.b16 %v72, %v71
  %v84 = vpack.c.b16 %v74, %v73
  %v85 = vpack.c.b16 %v76, %v75
  %v86 = vpack.c.b16 %v78, %v77
  %95 = vmatprep.subr.bf16.mxu0 0
  %96 = vmatpush1.bf16.msra.mxu0 %v79
  %97 = vmatprep.subr.bf16.mxu0 0
  %98 = vmatpush1.bf16.msra.mxu0 %v80
  %99 = vmatprep.subr.bf16.mxu0 0
  %100 = vmatpush1.bf16.msra.mxu0 %v81
  %101 = vmatprep.subr.bf16.mxu0 0
  %102 = vmatpush1.bf16.msra.mxu0 %v82
  %103 = vmatprep.subr.bf16.mxu0 0
  %104 = vmatpush1.bf16.msra.mxu0 %v83
  %105 = vmatprep.subr.bf16.mxu0 0
  %106 = vmatpush1.bf16.msra.mxu0 %v84
  %107 = vmatprep.subr.bf16.mxu0 0
  %108 = vmatpush1.bf16.msra.mxu0 %v85
  %109 = vmatprep.subr.bf16.mxu0 0
  %110 = vmatpush1.bf16.msra.mxu0 %v86
  %111 = vmatprep.subr.bf16.mxu0 0
  %112 = vmatpush1.bf16.msra.mxu0 0
  %113 = vmatprep.subr.bf16.mxu0 0
  %114 = vmatpush1.bf16.msra.mxu0 0
  %115 = vmatprep.subr.bf16.mxu0 0
  %116 = vmatpush1.bf16.msra.mxu0 0
  %117 = vmatprep.subr.bf16.mxu0 0
  %118 = vmatpush1.bf16.msra.mxu0 0
  %119 = vmatprep.subr.bf16.mxu0 0
  %120 = vmatpush1.bf16.msra.mxu0 0
  %121 = vmatprep.subr.bf16.mxu0 0
  %122 = vmatpush1.bf16.msra.mxu0 0
  %123 = vmatprep.subr.bf16.mxu0 0
  %124 = vmatpush1.bf16.msra.mxu0 0
  %125 = vmatprep.subr.bf16.mxu0 0
  %126 = vmatpush1.bf16.msra.mxu0 0
  %127 = vmatprep.mubr.bf16.mxu0 0
  %128 = vmatmul.mubr.bf16.gmra.mrb[0].mxu0 %v23
  %v129 = vpop.f32.mrb[0].mxu0
  %v130 = vadd.f32 %v45, %v129
  %v131 = vpop.f32.mrb[0].mxu0
  %v132 = vpop.f32.mrb[0].mxu0
  %v133 = vadd.f32 %v45, %v132
  %v134 = vpop.f32.mrb[0].mxu0
  %135 = vdwg.mxu0
  %v136 = vmax.f32 %v130, 0.0
  %v137 = vmax.f32 %v133, 0.0
  %v138 = vpack.c.bf16 %v137, %v136
  %v139 = vld [vmem:[%s3] sm:$0xf]
  %v140 = vld [vmem:[%s3 + $0x4] sm:$0xf]
  %v141 = vld [vmem:[%s3 + $0x8] sm:$0xf]
  %v142 = vld [vmem:[%s3 + $0xc] sm:$0xf]
  %v143 = vld [vmem:[%s3 + $0x10] sm:$0xf]
  %v144 = vld [vmem:[%s3 + $0x14] sm:$0xf]
  %v145 = vld [vmem:[%s3 + $0x18] sm:$0xf]
  %v146 = vld [vmem:[%s3 + $0x1c] sm:$0xf]
  %v147 = vld [vmem:[%s3 + $0x20] sm:$0xf]
  %v148 = vld [vmem:[%s3 + $0x24] sm:$0xf]
  %v149 = vld [vmem:[%s3 + $0x28] sm:$0xf]
  %v150 = vld [vmem:[%s3 + $0x2c] sm:$0xf]
  %v151 = vld [vmem:[%s3 + $0x30] sm:$0xf]
  %v152 = vld [vmem:[%s3 + $0x34] sm:$0xf]
  %v153 = vld [vmem:[%s3 + $0x38] sm:$0xf]
  %v154 = vld [vmem:[%s3 + $0x3c] sm:$0xf]
  %v155 = vld [vmem:[%s4] sm:$0x1]
  %v157 = vlaneseq
  %v158 = vshrl.u32 %v157, 7
  %v159 = vsub.s32 0, %v158
  %v160 = vrot.slane %v155, %v159
  %v178 = vunpack.c.l.b16 %v139
  %v179 = vunpack.c.l.b16 %v140
  %v180 = vunpack.c.l.b16 %v141
  %v181 = vunpack.c.l.b16 %v142
  %v182 = vunpack.c.l.b16 %v143
  %v183 = vunpack.c.l.b16 %v144
  %v184 = vunpack.c.l.b16 %v145
  %v185 = vunpack.c.l.b16 %v146
  %v186 = vunpack.c.l.b16 %v147
  %v187 = vunpack.c.l.b16 %v148
  %v188 = vunpack.c.l.b16 %v149
  %v189 = vunpack.c.l.b16 %v150
  %v190 = vunpack.c.l.b16 %v151
  %v191 = vunpack.c.l.b16 %v152
  %v192 = vunpack.c.l.b16 %v153
  %v193 = vunpack.c.l.b16 %v154
  %v194 = vpack.c.b16 %v179, %v178
  %v195 = vpack.c.b16 %v181, %v180
  %v196 = vpack.c.b16 %v183, %v182
  %v197 = vpack.c.b16 %v185, %v184
  %v198 = vpack.c.b16 %v187, %v186
  %v199 = vpack.c.b16 %v189, %v188
  %v200 = vpack.c.b16 %v191, %v190
  %v201 = vpack.c.b16 %v193, %v192
  %210 = vmatprep.subr.bf16.mxu0 0
  %211 = vmatpush1.bf16.msra.mxu0 %v194
  %212 = vmatprep.subr.bf16.mxu0 0
  %213 = vmatpush1.bf16.msra.mxu0 %v195
  %214 = vmatprep.subr.bf16.mxu0 0
  %215 = vmatpush1.bf16.msra.mxu0 %v196
  %216 = vmatprep.subr.bf16.mxu0 0
  %217 = vmatpush1.bf16.msra.mxu0 %v197
  %218 = vmatprep.subr.bf16.mxu0 0
  %219 = vmatpush1.bf16.msra.mxu0 %v198
  %220 = vmatprep.subr.bf16.mxu0 0
  %221 = vmatpush1.bf16.msra.mxu0 %v199
  %222 = vmatprep.subr.bf16.mxu0 0
  %223 = vmatpush1.bf16.msra.mxu0 %v200
  %224 = vmatprep.subr.bf16.mxu0 0
  %225 = vmatpush1.bf16.msra.mxu0 %v201
  %226 = vmatprep.subr.bf16.mxu0 0
  %227 = vmatpush1.bf16.msra.mxu0 0
  %228 = vmatprep.subr.bf16.mxu0 0
  %229 = vmatpush1.bf16.msra.mxu0 0
  %230 = vmatprep.subr.bf16.mxu0 0
  %231 = vmatpush1.bf16.msra.mxu0 0
  %232 = vmatprep.subr.bf16.mxu0 0
  %233 = vmatpush1.bf16.msra.mxu0 0
  %234 = vmatprep.subr.bf16.mxu0 0
  %235 = vmatpush1.bf16.msra.mxu0 0
  %236 = vmatprep.subr.bf16.mxu0 0
  %237 = vmatpush1.bf16.msra.mxu0 0
  %238 = vmatprep.subr.bf16.mxu0 0
  %239 = vmatpush1.bf16.msra.mxu0 0
  %240 = vmatprep.subr.bf16.mxu0 0
  %241 = vmatpush1.bf16.msra.mxu0 0
  %242 = vmatprep.mubr.bf16.mxu0 0
  %243 = vmatmul.mubr.bf16.gmra.mrb[0].mxu0 %v138
  %v244 = vpop.f32.mrb[0].mxu0
  %v245 = vadd.f32 %v160, %v244
  %v246 = vpop.f32.mrb[0].mxu0
  %v247 = vpop.f32.mrb[0].mxu0
  %v248 = vadd.f32 %v160, %v247
  %v249 = vpop.f32.mrb[0].mxu0
  %250 = vdwg.mxu0
  %v251 = vadd.f32 %v245, %v21
  %v252 = vadd.f32 %v248, %v22
  %253 = vst [vmem:[%s5] sm:$0xff] %v251
  %254 = vst [vmem:[%s5 + $0x8] sm:$0xff] %v252
  // Predicated region
  $region22: #{position_wise_feed_forward.1} parent=0 // pred_check
    _
  $region23: #{position_wise_feed_forward.1} parent=0 // pred_check_branch
    %256 = sbr.rel (0) target = $region25
  $region24: #{position_wise_feed_forward.1} parent=0 // pred_region
    _
  $region25: #{position_wise_feed_forward.1} parent=0 // pred_fallthru
    _
  // Predicated region
  $region26: #{position_wise_feed_forward.1} parent=0 // pred_check
    _
  $region27: #{position_wise_feed_forward.1} parent=0 // pred_check_branch
    %258 = sbr.rel (0) target = $region29
  $region28: #{position_wise_feed_forward.1} parent=0 // pred_region
    _
  $region29: #{position_wise_feed_forward.1} parent=0 // pred_fallthru
    _

</llo_original>
